<compile_context>
chip_gen: v7x
topology: tpu7x:2x2x1
jax: 0.10.0
libtpu: 0.0.40
codegen_flags: <defaults>
</compile_context>

<pallas_src>
import jax
import jax.numpy as jnp
from jax import lax
from jax.experimental import pallas as pl
from jax.experimental.pallas import tpu as pltpu


def _make_conv_relu_kernel(N, HW):
    def kernel(p_ref, w_ref, o_ref):
        # p_ref : (K+1, N*HW)   im2col patches + ones row (bias folded in)
        # w_ref : (Cout, K+1)   flattened conv weight with bias column
        # o_ref : (N, Cout, HW) output, HW on lanes (lane-dense, NCHW order)
        res = jnp.dot(w_ref[...], p_ref[...],
                      preferred_element_type=jnp.float32)      # (Cout, N*HW)
        res = jnp.maximum(res, 0.0)
        # N is tiny and static; each slice start is a multiple of HW=256
        # (multiple of 128) -> unmasked, lane-aligned vreg-group stores.
        for n in range(N):
            o_ref[n] = res[:, n * HW:(n + 1) * HW].astype(o_ref.dtype)

    return kernel


def flattener_forward(x_nchw, w_oihw, b):
    """Equivalent of Flattener(conv_encoder)(x) with
    conv_encoder = Conv2d(Cin, Cout, 3, stride=1, padding=1) + ReLU.

    Args:
      x_nchw: (N, Cin, H, W) float32
      w_oihw: (Cout, Cin, KH, KW) float32  (PyTorch conv weight layout)
      b:      (Cout,) float32
    Returns:
      (N, Cout*H*W) float32, flattened in PyTorch NCHW order.
    """
    N, Cin, H, W = x_nchw.shape
    Cout, _, KH, KW = w_oihw.shape
    ph, pw = KH // 2, KW // 2
    HW = H * W
    K = Cin * KH * KW

    # --- glue: zero-pad + im2col with batch folded into the lane axis ---
    # K index ordering = (ci, kh, kw), matching w_oihw.reshape(Cout, K).
    x_pad = jnp.pad(x_nchw, ((0, 0), (0, 0), (ph, ph), (pw, pw)))
    taps = [x_pad[:, :, kh:kh + H, kw:kw + W]            # each (N, Cin, H, W)
            for kh in range(KH) for kw in range(KW)]
    patches = jnp.stack(taps, axis=2)                    # (N, Cin, KH*KW, H, W)
    patches = patches.transpose(1, 2, 0, 3, 4).reshape(K, N * HW)   # (36, 512)

    # Fold bias into the matmul: ones row on patches, bias column on weight.
    patches = jnp.concatenate(
        [patches, jnp.ones((1, N * HW), patches.dtype)], axis=0)    # (37, 512)
    w_aug = jnp.concatenate(
        [w_oihw.reshape(Cout, K), b.reshape(Cout, 1)], axis=1)      # (8, 37)

    kernel = _make_conv_relu_kernel(N, HW)

    flops = 2 * Cout * (K + 1) * N * HW
    bytes_accessed = 4 * ((K + 1) * N * HW + Cout * (K + 1) + N * Cout * HW)

    # Single grid step over the whole batch; every block is the full array so
    # the (8,128) divisibility rule is bypassed and everything sits in VMEM.
    y = pl.pallas_call(
        kernel,
        out_shape=jax.ShapeDtypeStruct((N, Cout, HW), jnp.float32),
        grid=(1,),
        in_specs=[
            pl.BlockSpec((K + 1, N * HW), lambda i: (0, 0)),
            pl.BlockSpec((Cout, K + 1), lambda i: (0, 0)),
        ],
        out_specs=pl.BlockSpec((N, Cout, HW), lambda i: (0, 0, 0)),
        compiler_params=pltpu.CompilerParams(
            dimension_semantics=("arbitrary",),
            # Let XLA fuse the pad/stack/reshape im2col producer into the
            # patches operand instead of materializing it in HBM.
            allow_input_fusion=[True, False]),
        cost_estimate=pl.CostEstimate(
            flops=flops, transcendentals=0, bytes_accessed=bytes_accessed),
    )(patches, w_aug)

    # --- glue: flatten.  (N, Cout, HW) is already NCHW order -> free reshape.
    return y.reshape(N, Cout * HW)


def _reference(x_nchw, w_oihw, b):
    """Pure-JAX reference (conv + bias + ReLU + flatten) for validation."""
    y = lax.conv_general_dilated(
        x_nchw, w_oihw,
        window_strides=(1, 1), padding="SAME",
        dimension_numbers=("NCHW", "OIHW", "NCHW"))
    y = y + b.reshape(1, -1, 1, 1)
    y = jnp.maximum(y, 0.0)
    return y.reshape(y.shape[0], -1)


if __name__ == "__main__":
    N, Cin, H, W = 2, 4, 16, 16
    Cout, KH, KW = 8, 3, 3

    key = jax.random.PRNGKey(0)
    kx, kw, kb = jax.random.split(key, 3)

    x = jax.random.normal(kx, (N, Cin, H, W), dtype=jnp.float32)
    # deterministic, roughly PyTorch-default-scale init
    fan_in = Cin * KH * KW
    bound = 1.0 / jnp.sqrt(fan_in)
    w = jax.random.uniform(kw, (Cout, Cin, KH, KW),
                           minval=-bound, maxval=bound, dtype=jnp.float32)
    b = jax.random.uniform(kb, (Cout,),
                           minval=-bound, maxval=bound, dtype=jnp.float32)

    out = jax.jit(flattener_forward)(x, w, b)
    out = jax.block_until_ready(out)

    ref = _reference(x, w, b)
    assert out.shape == (N, Cout * H * W), out.shape
    assert jnp.allclose(out, ref, atol=1e-4, rtol=1e-4), \
        float(jnp.max(jnp.abs(out - ref)))

    print("KERNEL_OK")
</pallas_src>

<mosaic_0001>
module attributes {stable_mosaic.version = 11 : i64} {
  func.func @kernel(%arg0: i32, %arg1: memref<37x512xf32, #tpu.memory_space<vmem>>, %arg2: memref<8x37xf32, #tpu.memory_space<vmem>>, %arg3: memref<2x8x256xf32, #tpu.memory_space<vmem>>) attributes {dimension_semantics = [#tpu.dimension_semantics<arbitrary>], iteration_bounds = array<i64: 1>, scalar_prefetch = 0 : i64, scratch_operands = 0 : i64, tpu.core_type = #tpu.core_type<tc>, window_params = [{pipeline_mode = #tpu.pipeline_mode<synchronous>, transform_indices = @transform_0, window_bounds = array<i64: 37, 512>}, {pipeline_mode = #tpu.pipeline_mode<synchronous>, transform_indices = @transform_1, window_bounds = array<i64: 8, 37>}, {pipeline_mode = #tpu.pipeline_mode<synchronous>, transform_indices = @transform_2, window_bounds = array<i64: 2, 8, 256>}]} {
    %c0 = arith.constant 0 : index
    %c0_0 = arith.constant 0 : index
    %0 = vector.load %arg2[%c0, %c0_0] : memref<8x37xf32, #tpu.memory_space<vmem>>, vector<8x37xf32>
    %c0_1 = arith.constant 0 : index
    %c0_2 = arith.constant 0 : index
    %1 = vector.load %arg1[%c0_1, %c0_2] : memref<37x512xf32, #tpu.memory_space<vmem>>, vector<37x512xf32>
    %cst = arith.constant dense<0.000000e+00> : vector<8x512xf32>
    %2 = tpu.matmul %0, %1, %cst {dimension_numbers = #tpu.dot_dimension_numbers<[1], [0], [0], [1], [0, 0, 1, 1], [], []>} : vector<8x37xf32>, vector<37x512xf32>, vector<8x512xf32> -> vector<8x512xf32>
    %cst_3 = arith.constant 0.000000e+00 : f32
    %3 = vector.broadcast %cst_3 : f32 to vector<8x512xf32>
    %4 = arith.maximumf %2, %3 : vector<8x512xf32>
    %5 = vector.extract_strided_slice %4 {offsets = [0, 0], sizes = [8, 256], strides = [1, 1]} : vector<8x512xf32> to vector<8x256xf32>
    %c0_4 = arith.constant 0 : index
    %c0_5 = arith.constant 0 : index
    %c0_6 = arith.constant 0 : index
    %6 = vector.load %arg3[%c0_4, %c0_5, %c0_6] : memref<2x8x256xf32, #tpu.memory_space<vmem>>, vector<1x8x256xf32>
    %7 = vector.shape_cast %6 : vector<1x8x256xf32> to vector<8x256xf32>
    %8 = vector.shape_cast %5 : vector<8x256xf32> to vector<1x8x256xf32>
    tpu.vector_store %arg3[%c0_4, %c0_5, %c0_6], %8 {strides = array<i32>} : memref<2x8x256xf32, #tpu.memory_space<vmem>>, vector<1x8x256xf32>,
    %9 = vector.extract_strided_slice %4 {offsets = [0, 256], sizes = [8, 256], strides = [1, 1]} : vector<8x512xf32> to vector<8x256xf32>
    %c1 = arith.constant 1 : index
    %c0_7 = arith.constant 0 : index
    %c0_8 = arith.constant 0 : index
    %10 = vector.load %arg3[%c1, %c0_7, %c0_8] : memref<2x8x256xf32, #tpu.memory_space<vmem>>, vector<1x8x256xf32>
    %11 = vector.shape_cast %10 : vector<1x8x256xf32> to vector<8x256xf32>
    %12 = vector.shape_cast %9 : vector<8x256xf32> to vector<1x8x256xf32>
    tpu.vector_store %arg3[%c1, %c0_7, %c0_8], %12 {strides = array<i32>} : memref<2x8x256xf32, #tpu.memory_space<vmem>>, vector<1x8x256xf32>,
    return
  }
  func.func @transform_0(%arg0: i32) -> (i32, i32) {
    %c0_i32 = arith.constant 0 : i32
    %c0_i32_0 = arith.constant 0 : i32
    %c0_i32_1 = arith.constant 0 : i32
    return %c0_i32, %c0_i32_0 : i32, i32
  }
  func.func @transform_1(%arg0: i32) -> (i32, i32) {
    %c0_i32 = arith.constant 0 : i32
    %c0_i32_0 = arith.constant 0 : i32
    %c0_i32_1 = arith.constant 0 : i32
    return %c0_i32, %c0_i32_0 : i32, i32
  }
  func.func @transform_2(%arg0: i32) -> (i32, i32, i32) {
    %c0_i32 = arith.constant 0 : i32
    %c0_i32_0 = arith.constant 0 : i32
    %c0_i32_1 = arith.constant 0 : i32
    %c0_i32_2 = arith.constant 0 : i32
    return %c0_i32, %c0_i32_0, %c0_i32_1 : i32, i32, i32
  }
}

</mosaic_0001>

<llo_original>
// kernel: flattener_forward.2
$region0: #{flattener_forward.2}
  #allocation0 [shape = 'u32[]', space=smem, size = 0x4, offset = 0x4, fixed_abs, tag = 'smem constant byte address 0x4 - core index']
  #allocation1 [shape = 'u32[144,128]{1,0:T(1,128)}', space=vmem, size = 0x12000, scoped, tag = 'internal scratch']
  #allocation2 [shape = 'u32[2048]{0}', space=vmem, size = 0x2000, scoped, tag = 'scoped memory for flattener_forward.2']
  #allocation3 [shape = 'u32[2048]{0}', space=vmem, size = 0x2000, scoped, tag = 'scoped memory for flattener_forward.2']
  #allocation4 [shape = 'u32[2048]{0}', space=vmem, size = 0x2000, scoped, tag = 'scoped memory for flattener_forward.2']
  #allocation5 [shape = 'u32[2048]{0}', space=vmem, size = 0x2000, scoped, tag = 'scoped memory for flattener_forward.2']
  #allocation6 [shape = 'u32[2048]{0}', space=vmem, size = 0x2000, scoped, tag = 'scoped memory for flattener_forward.2']
  %s0 = inlined_call_operand.vmem [shape: f32[8,37], index: 0, kind: input, shape index: {}]
  %s1 = inlined_call_operand.vmem [shape: f32[36,512], index: 1, kind: input, shape index: {}]
  %s2 = inlined_call_operand.<no memory space> [shape: f32[], index: 2, kind: input, shape index: {}]
  %s3 = inlined_call_operand.vmem [shape: f32[2,8,256], index: 3, kind: output, shape index: {}]
  %s4 = sld [smem:[#allocation0]]
  $region18: #{flattener_forward.2} parent=0
    _
  %s6 = ssub.s32 1, %s4
  %s7 = scalar_select 0, %s6, %s4
  %v8 = vstv %s2
  $region1: #{flattener_forward.2} parent=0
    #allocation7 [shape = 'u8[81920]{0}', space=vmem, size = 0x14000, dematerialized = true, scoped, tag = 'FusionAdapter Buffer %fusion.1 = f32[37,512]{1,0:T(8,128)} fusion(%param_1.9, %param_2), kind=kLoop, calls=%fused_computation.9.clone, metadata={op_name="jit(flattener_forward)/concatenate" stack_frame_id=12}']
    // Predicated region
    $region2: #{flattener_forward.2} parent=1 // pred_check
      _
    $region3: #{flattener_forward.2} parent=1 // pred_check_branch
      %10 = sbr.rel (0) target = $region5
    $region4: #{flattener_forward.2} parent=1 // pred_region
      _
    $region5: #{flattener_forward.2} parent=1 // pred_fallthru
      _
    // Predicated region
    $region6: #{flattener_forward.2} parent=1 // pred_check
      _
    $region7: #{flattener_forward.2} parent=1 // pred_check_branch
      %12 = sbr.rel (0) target = $region9
    $region8: #{flattener_forward.2} parent=1 // pred_region
      _
    $region9: #{flattener_forward.2} parent=1 // pred_fallthru
      _
    %v13 = vld [vmem:[%s1] sm:$0xff]
    %v14 = vlaneseq
    %v15 = vshrl.u32 %v14, 7
    %vm17 = vcmp.lt.s32.totalorder %v15, 36
    %v18 = vsel %vm17, %v13, %v8
    %20 = vst [vmem:[#allocation7] sm:$0xff] %v18
    %s21 = scalar_lea.vmem %s1, 8
    %v22 = vld [vmem:[%s21] sm:$0xff]
    %v23 = vlaneseq
    %v24 = vshrl.u32 %v23, 7
    %vm26 = vcmp.lt.s32.totalorder %v24, 36
    %v27 = vsel %vm26, %v22, %v8
    %s28 = scalar_lea.vmem [#allocation7], 8
    %30 = vst [vmem:[%s28] sm:$0xff] %v27
    %s31 = scalar_lea.vmem %s1, 16
    %v32 = vld [vmem:[%s31] sm:$0xff]
    %v33 = vlaneseq
    %v34 = vshrl.u32 %v33, 7
    %vm36 = vcmp.lt.s32.totalorder %v34, 36
    %v37 = vsel %vm36, %v32, %v8
    %s38 = scalar_lea.vmem [#allocation7], 16
    %40 = vst [vmem:[%s38] sm:$0xff] %v37
    %s41 = scalar_lea.vmem %s1, 24
    %v42 = vld [vmem:[%s41] sm:$0xff]
    %v43 = vlaneseq
    %v44 = vshrl.u32 %v43, 7
    %vm46 = vcmp.lt.s32.totalorder %v44, 36
    %v47 = vsel %vm46, %v42, %v8
    %s48 = scalar_lea.vmem [#allocation7], 24
    %50 = vst [vmem:[%s48] sm:$0xff] %v47
    %s51 = scalar_lea.vmem %s1, 32
    %v52 = vld [vmem:[%s51] sm:$0xff]
    %v53 = vlaneseq
    %v54 = vshrl.u32 %v53, 7
    %v55 = vadd.s32 %v54, 8
    %vm56 = vcmp.lt.s32.totalorder %v55, 36
    %v57 = vsel %vm56, %v52, %v8
    %s58 = scalar_lea.vmem [#allocation7], 32
    %60 = vst [vmem:[%s58] sm:$0xff] %v57
    %s61 = scalar_lea.vmem %s1, 40
    %v62 = vld [vmem:[%s61] sm:$0xff]
    %v63 = vlaneseq
    %v64 = vshrl.u32 %v63, 7
    %v65 = vadd.s32 %v64, 8
    %vm66 = vcmp.lt.s32.totalorder %v65, 36
    %v67 = vsel %vm66, %v62, %v8
    %s68 = scalar_lea.vmem [#allocation7], 40
    %70 = vst [vmem:[%s68] sm:$0xff] %v67
    %s71 = scalar_lea.vmem %s1, 48
    %v72 = vld [vmem:[%s71] sm:$0xff]
    %v73 = vlaneseq
    %v74 = vshrl.u32 %v73, 7
    %v75 = vadd.s32 %v74, 8
    %vm76 = vcmp.lt.s32.totalorder %v75, 36
    %v77 = vsel %vm76, %v72, %v8
    %s78 = scalar_lea.vmem [#allocation7], 48
    %80 = vst [vmem:[%s78] sm:$0xff] %v77
    %s81 = scalar_lea.vmem %s1, 56
    %v82 = vld [vmem:[%s81] sm:$0xff]
    %v83 = vlaneseq
    %v84 = vshrl.u32 %v83, 7
    %v85 = vadd.s32 %v84, 8
    %vm86 = vcmp.lt.s32.totalorder %v85, 36
    %v87 = vsel %vm86, %v82, %v8
    %s88 = scalar_lea.vmem [#allocation7], 56
    %90 = vst [vmem:[%s88] sm:$0xff] %v87
    %s91 = scalar_lea.vmem %s1, 64
    %v92 = vld [vmem:[%s91] sm:$0xff]
    %v93 = vlaneseq
    %v94 = vshrl.u32 %v93, 7
    %v95 = vadd.s32 %v94, 16
    %vm96 = vcmp.lt.s32.totalorder %v95, 36
    %v97 = vsel %vm96, %v92, %v8
    %s98 = scalar_lea.vmem [#allocation7], 64
    %100 = vst [vmem:[%s98] sm:$0xff] %v97
    %s101 = scalar_lea.vmem %s1, 72
    %v102 = vld [vmem:[%s101] sm:$0xff]
    %v103 = vlaneseq
    %v104 = vshrl.u32 %v103, 7
    %v105 = vadd.s32 %v104, 16
    %vm106 = vcmp.lt.s32.totalorder %v105, 36
    %v107 = vsel %vm106, %v102, %v8
    %s108 = scalar_lea.vmem [#allocation7], 72
    %110 = vst [vmem:[%s108] sm:$0xff] %v107
    %s111 = scalar_lea.vmem %s1, 80
    %v112 = vld [vmem:[%s111] sm:$0xff]
    %v113 = vlaneseq
    %v114 = vshrl.u32 %v113, 7
    %v115 = vadd.s32 %v114, 16
    %vm116 = vcmp.lt.s32.totalorder %v115, 36
    %v117 = vsel %vm116, %v112, %v8
    %s118 = scalar_lea.vmem [#allocation7], 80
    %120 = vst [vmem:[%s118] sm:$0xff] %v117
    %s121 = scalar_lea.vmem %s1, 88
    %v122 = vld [vmem:[%s121] sm:$0xff]
    %v123 = vlaneseq
    %v124 = vshrl.u32 %v123, 7
    %v125 = vadd.s32 %v124, 16
    %vm126 = vcmp.lt.s32.totalorder %v125, 36
    %v127 = vsel %vm126, %v122, %v8
    %s128 = scalar_lea.vmem [#allocation7], 88
    %130 = vst [vmem:[%s128] sm:$0xff] %v127
    %s131 = scalar_lea.vmem %s1, 96
    %v132 = vld [vmem:[%s131] sm:$0xff]
    %v133 = vlaneseq
    %v134 = vshrl.u32 %v133, 7
    %v135 = vadd.s32 %v134, 24
    %vm136 = vcmp.lt.s32.totalorder %v135, 36
    %v137 = vsel %vm136, %v132, %v8
    %s138 = scalar_lea.vmem [#allocation7], 96
    %140 = vst [vmem:[%s138] sm:$0xff] %v137
    %s141 = scalar_lea.vmem %s1, 104
    %v142 = vld [vmem:[%s141] sm:$0xff]
    %v143 = vlaneseq
    %v144 = vshrl.u32 %v143, 7
    %v145 = vadd.s32 %v144, 24
    %vm146 = vcmp.lt.s32.totalorder %v145, 36
    %v147 = vsel %vm146, %v142, %v8
    %s148 = scalar_lea.vmem [#allocation7], 104
    %150 = vst [vmem:[%s148] sm:$0xff] %v147
    %s151 = scalar_lea.vmem %s1, 112
    %v152 = vld [vmem:[%s151] sm:$0xff]
    %v153 = vlaneseq
    %v154 = vshrl.u32 %v153, 7
    %v155 = vadd.s32 %v154, 24
    %vm156 = vcmp.lt.s32.totalorder %v155, 36
    %v157 = vsel %vm156, %v152, %v8
    %s158 = scalar_lea.vmem [#allocation7], 112
    %160 = vst [vmem:[%s158] sm:$0xff] %v157
    %s161 = scalar_lea.vmem %s1, 120
    %v162 = vld [vmem:[%s161] sm:$0xff]
    %v163 = vlaneseq
    %v164 = vshrl.u32 %v163, 7
    %v165 = vadd.s32 %v164, 24
    %vm166 = vcmp.lt.s32.totalorder %v165, 36
    %v167 = vsel %vm166, %v162, %v8
    %s168 = scalar_lea.vmem [#allocation7], 120
    %170 = vst [vmem:[%s168] sm:$0xff] %v167
    %s171 = scalar_lea.vmem %s1, 128
    %v172 = vld [vmem:[%s171] sm:$0xff]
    %v173 = vlaneseq
    %v174 = vshrl.u32 %v173, 7
    %v175 = vadd.s32 %v174, 32
    %vm176 = vcmp.lt.s32.totalorder %v175, 36
    %v177 = vsel %vm176, %v172, %v8
    %s178 = scalar_lea.vmem [#allocation7], 128
    %180 = vst [vmem:[%s178] sm:$0xff] %v177
    %s181 = scalar_lea.vmem %s1, 136
    %v182 = vld [vmem:[%s181] sm:$0xff]
    %v183 = vlaneseq
    %v184 = vshrl.u32 %v183, 7
    %v185 = vadd.s32 %v184, 32
    %vm186 = vcmp.lt.s32.totalorder %v185, 36
    %v187 = vsel %vm186, %v182, %v8
    %s188 = scalar_lea.vmem [#allocation7], 136
    %190 = vst [vmem:[%s188] sm:$0xff] %v187
    %s191 = scalar_lea.vmem %s1, 144
    %v192 = vld [vmem:[%s191] sm:$0xff]
    %v193 = vlaneseq
    %v194 = vshrl.u32 %v193, 7
    %v195 = vadd.s32 %v194, 32
    %vm196 = vcmp.lt.s32.totalorder %v195, 36
    %v197 = vsel %vm196, %v192, %v8
    %s198 = scalar_lea.vmem [#allocation7], 144
    %200 = vst [vmem:[%s198] sm:$0xff] %v197
    %s201 = scalar_lea.vmem %s1, 152
    %v202 = vld [vmem:[%s201] sm:$0xff]
    %v203 = vlaneseq
    %v204 = vshrl.u32 %v203, 7
    %v205 = vadd.s32 %v204, 32
    %vm206 = vcmp.lt.s32.totalorder %v205, 36
    %v207 = vsel %vm206, %v202, %v8
    %s208 = scalar_lea.vmem [#allocation7], 152
    %210 = vst [vmem:[%s208] sm:$0xff] %v207
    %v211 = vld [vmem:[%s0] sm:$0xff]
    %v212 = vld [vmem:[#allocation7] sm:$0xff]
    %v213 = vld [vmem:[#allocation7 + $0x8] sm:$0xff]
    %v214 = vld [vmem:[#allocation7 + $0x10] sm:$0xff]
    %v215 = vld [vmem:[#allocation7 + $0x18] sm:$0xff]
    %v216 = vld [vmem:[#allocation7 + $0x20] sm:$0xff]
    %v217 = vld [vmem:[#allocation7 + $0x28] sm:$0xff]
    %v218 = vld [vmem:[#allocation7 + $0x30] sm:$0xff]
    %v219 = vld [vmem:[#allocation7 + $0x38] sm:$0xff]
    %v220 = vld [vmem:[#allocation7 + $0x40] sm:$0xff]
    %v221 = vld [vmem:[#allocation7 + $0x48] sm:$0xff]
    %v222 = vld [vmem:[#allocation7 + $0x50] sm:$0xff]
    %v223 = vld [vmem:[#allocation7 + $0x58] sm:$0xff]
    %v224 = vld [vmem:[#allocation7 + $0x60] sm:$0xff]
    %v225 = vld [vmem:[#allocation7 + $0x68] sm:$0xff]
    %v226 = vld [vmem:[#allocation7 + $0x70] sm:$0xff]
    %v227 = vld [vmem:[#allocation7 + $0x78] sm:$0xff]
    %v228 = vld [vmem:[#allocation7 + $0x80] sm:$0x1f]
    %v229 = vld [vmem:[#allocation7 + $0x88] sm:$0x1f]
    %v230 = vld [vmem:[#allocation7 + $0x90] sm:$0x1f]
    %v231 = vld [vmem:[#allocation7 + $0x98] sm:$0x1f]
    %vm232 = vcmask 302080
    %v234 = vsel %vm232, %v211, 0
    %vm236 = vcmask 1044480
    %v238 = vsel %vm236, %v228, 0
    %v241 = vsel %vm236, %v229, 0
    %v244 = vsel %vm236, %v230, 0
    %v247 = vsel %vm236, %v231, 0
    %249 = vmatprep.subr.mxu0 %v213
    %250 = vmatpush1.msra.mxu0 %v212
    %251 = vmatprep.subr.mxu0 %v217
    %252 = vmatpush1.msra.mxu0 %v216
    %253 = vmatprep.subr.mxu0 %v221
    %254 = vmatpush1.msra.mxu0 %v220
    %255 = vmatprep.subr.mxu0 %v225
    %256 = vmatpush1.msra.mxu0 %v224
    %257 = vmatprep.subr.mxu0 %v241
    %258 = vmatpush1.msra.mxu0 %v238
    %259 = vmatprep.subr.mxu0 0.0
    %260 = vmatpush1.msra.mxu0 0.0
    %261 = vmatprep.subr.mxu0 0.0
    %262 = vmatpush1.msra.mxu0 0.0
    %263 = vmatprep.subr.mxu0 0.0
    %264 = vmatpush1.msra.mxu0 0.0
    %265 = vmatprep.subr.mxu0 0.0
    %266 = vmatpush1.msra.mxu0 0.0
    %267 = vmatprep.subr.mxu0 0.0
    %268 = vmatpush1.msra.mxu0 0.0
    %269 = vmatprep.subr.mxu0 0.0
    %270 = vmatpush1.msra.mxu0 0.0
    %271 = vmatprep.subr.mxu0 0.0
    %272 = vmatpush1.msra.mxu0 0.0
    %273 = vmatprep.subr.mxu0 0.0
    %274 = vmatpush1.msra.mxu0 0.0
    %275 = vmatprep.subr.mxu0 0.0
    %276 = vmatpush1.msra.mxu0 0.0
    %277 = vmatprep.subr.mxu0 0.0
    %278 = vmatpush1.msra.mxu0 0.0
    %279 = vmatprep.subr.mxu0 0.0
    %280 = vmatpush1.msra.mxu0 0.0
    %281 = vmatprep.subr.mxu0 0.0
    %282 = vmatpush1.msra.mxu0 0.0
    %283 = vmatprep.subr.mxu0 0.0
    %284 = vmatpush1.msra.mxu0 0.0
    %285 = vmatprep.subr.mxu0 0.0
    %286 = vmatpush1.msra.mxu0 0.0
    %287 = vmatprep.subr.mxu0 0.0
    %288 = vmatpush1.msra.mxu0 0.0
    %289 = vmatprep.subr.mxu0 0.0
    %290 = vmatpush1.msra.mxu0 0.0
    %291 = vmatprep.subr.mxu0 0.0
    %292 = vmatpush1.msra.mxu0 0.0
    %293 = vmatprep.subr.mxu0 0.0
    %294 = vmatpush1.msra.mxu0 0.0
    %295 = vmatprep.subr.mxu0 0.0
    %296 = vmatpush1.msra.mxu0 0.0
    %297 = vmatprep.subr.mxu0 0.0
    %298 = vmatpush1.msra.mxu0 0.0
    %299 = vmatprep.subr.mxu0 0.0
    %300 = vmatpush1.msra.mxu0 0.0
    %301 = vmatprep.subr.mxu0 0.0
    %302 = vmatpush1.msra.mxu0 0.0
    %303 = vmatprep.subr.mxu0 0.0
    %304 = vmatpush1.msra.mxu0 0.0
    %305 = vmatprep.subr.mxu0 0.0
    %306 = vmatpush1.msra.mxu0 0.0
    %307 = vmatprep.subr.mxu0 0.0
    %308 = vmatpush1.msra.mxu0 0.0
    %309 = vmatprep.subr.mxu0 0.0
    %310 = vmatpush1.msra.mxu0 0.0
    %311 = vmatprep.subr.mxu0 0.0
    %312 = vmatpush1.msra.mxu0 0.0
    %313 = vmatprep.mubr.f32.mxu0 0.0
    %314 = vmatmul.mubr.f32.gmra.mrb[0].mxu0 %v234
    %v315 = vpop.f32.mrb[0].mxu0
    %v316 = vadd.f32 0.0, %v315
    %v317 = vpop.f32.mrb[0].mxu0
    %v318 = vadd.f32 0.0, %v317
    %319 = vdwg.mxu0
    %320 = vmatprep.subr.mxu0 %v215
    %321 = vmatpush1.msra.mxu0 %v214
    %322 = vmatprep.subr.mxu0 %v219
    %323 = vmatpush1.msra.mxu0 %v218
    %324 = vmatprep.subr.mxu0 %v223
    %325 = vmatpush1.msra.mxu0 %v222
    %326 = vmatprep.subr.mxu0 %v227
    %327 = vmatpush1.msra.mxu0 %v226
    %328 = vmatprep.subr.mxu0 %v247
    %329 = vmatpush1.msra.mxu0 %v244
    %330 = vmatprep.subr.mxu0 0.0
    %331 = vmatpush1.msra.mxu0 0.0
    %332 = vmatprep.subr.mxu0 0.0
    %333 = vmatpush1.msra.mxu0 0.0
    %334 = vmatprep.subr.mxu0 0.0
    %335 = vmatpush1.msra.mxu0 0.0
    %336 = vmatprep.subr.mxu0 0.0
    %337 = vmatpush1.msra.mxu0 0.0
    %338 = vmatprep.subr.mxu0 0.0
    %339 = vmatpush1.msra.mxu0 0.0
    %340 = vmatprep.subr.mxu0 0.0
    %341 = vmatpush1.msra.mxu0 0.0
    %342 = vmatprep.subr.mxu0 0.0
    %343 = vmatpush1.msra.mxu0 0.0
    %344 = vmatprep.subr.mxu0 0.0
    %345 = vmatpush1.msra.mxu0 0.0
    %346 = vmatprep.subr.mxu0 0.0
    %347 = vmatpush1.msra.mxu0 0.0
    %348 = vmatprep.subr.mxu0 0.0
    %349 = vmatpush1.msra.mxu0 0.0
    %350 = vmatprep.subr.mxu0 0.0
    %351 = vmatpush1.msra.mxu0 0.0
    %352 = vmatprep.subr.mxu0 0.0
    %353 = vmatpush1.msra.mxu0 0.0
    %354 = vmatprep.subr.mxu0 0.0
    %355 = vmatpush1.msra.mxu0 0.0
    %356 = vmatprep.subr.mxu0 0.0
    %357 = vmatpush1.msra.mxu0 0.0
    %358 = vmatprep.subr.mxu0 0.0
    %359 = vmatpush1.msra.mxu0 0.0
    %360 = vmatprep.subr.mxu0 0.0
    %361 = vmatpush1.msra.mxu0 0.0
    %362 = vmatprep.subr.mxu0 0.0
    %363 = vmatpush1.msra.mxu0 0.0
    %364 = vmatprep.subr.mxu0 0.0
    %365 = vmatpush1.msra.mxu0 0.0
    %366 = vmatprep.subr.mxu0 0.0
    %367 = vmatpush1.msra.mxu0 0.0
    %368 = vmatprep.subr.mxu0 0.0
    %369 = vmatpush1.msra.mxu0 0.0
    %370 = vmatprep.subr.mxu0 0.0
    %371 = vmatpush1.msra.mxu0 0.0
    %372 = vmatprep.subr.mxu0 0.0
    %373 = vmatpush1.msra.mxu0 0.0
    %374 = vmatprep.subr.mxu0 0.0
    %375 = vmatpush1.msra.mxu0 0.0
    %376 = vmatprep.subr.mxu0 0.0
    %377 = vmatpush1.msra.mxu0 0.0
    %378 = vmatprep.subr.mxu0 0.0
    %379 = vmatpush1.msra.mxu0 0.0
    %380 = vmatprep.subr.mxu0 0.0
    %381 = vmatpush1.msra.mxu0 0.0
    %382 = vmatprep.subr.mxu0 0.0
    %383 = vmatpush1.msra.mxu0 0.0
    %384 = vmatprep.mubr.f32.mxu0 0.0
    %385 = vmatmul.mubr.f32.gmra.mrb[0].mxu0 %v234
    %v386 = vpop.f32.mrb[0].mxu0
    %v387 = vadd.f32 0.0, %v386
    %v388 = vpop.f32.mrb[0].mxu0
    %v389 = vadd.f32 0.0, %v388
    %390 = vdwg.mxu0
    %v391 = vmax.f32 %v316, 0.0
    %v392 = vmax.f32 %v318, 0.0
    %v393 = vmax.f32 %v387, 0.0
    %v394 = vmax.f32 %v389, 0.0
    %395 = vst [vmem:[%s3] sm:$0xff] %v391
    %396 = vst [vmem:[%s3 + $0x8] sm:$0xff] %v392
    %s397 = scalar_lea.vmem %s3, 16
    %398 = vst [vmem:[%s397] sm:$0xff] %v393
    %399 = vst [vmem:[%s397 + $0x8] sm:$0xff] %v394
    // Predicated region
    $region10: #{flattener_forward.2} parent=1 // pred_check
      _
    $region11: #{flattener_forward.2} parent=1 // pred_check_branch
      %401 = sbr.rel (0) target = $region13
    $region12: #{flattener_forward.2} parent=1 // pred_region
      _
    $region13: #{flattener_forward.2} parent=1 // pred_fallthru
      _
    // Predicated region
    $region14: #{flattener_forward.2} parent=1 // pred_check
      _
    $region15: #{flattener_forward.2} parent=1 // pred_check_branch
      %403 = sbr.rel (0) target = $region17
    $region16: #{flattener_forward.2} parent=1 // pred_region
      _
    $region17: #{flattener_forward.2} parent=1 // pred_fallthru
      _

</llo_original>
